<compile_context>
chip_gen: v7x
topology: tpu7x:2x2x1
jax: 0.10.0
libtpu: 0.0.40
codegen_flags: <defaults>
</compile_context>

<pallas_src>
import jax
import jax.numpy as jnp
import numpy as np
from jax.experimental import pallas as pl
from jax.experimental.pallas import tpu as pltpu

_MXU_DTYPE = jnp.bfloat16


# ----------------------------------------------------------------------------
# VMEM budgeting / tile selection
# ----------------------------------------------------------------------------
def _round_up(x, m):
    return ((x + m - 1) // m) * m


def _vmem_limits():
    """Returns (vmem_limit_bytes for the compiler, byte budget for tile planning)."""
    try:
        cap = getattr(pltpu.get_tpu_info(), "vmem_capacity_bytes", None)
    except Exception:
        cap = None
    if not cap:
        cap = 64 * 1024 * 1024            # conservative fallback: v7x per-TensorCore VMEM
    cap = int(min(max(int(cap), 64 * 1024 * 1024), 128 * 1024 * 1024))
    limit = cap - 16 * 1024 * 1024        # scoped limit requested from the compiler
    budget = limit - 8 * 1024 * 1024      # what tile planning may consume (extra headroom)
    return limit, budget


def _working_set_bytes(tm, tf, d_model, x_bytes, out_bytes):
    """Conservative per-step VMEM estimate (assumes double-buffered inputs/outputs)."""
    wb = jnp.dtype(_MXU_DTYPE).itemsize
    b = 2 * tm * d_model * x_bytes          # x tile (double buffered)
    b += 2 * d_model * tf * wb              # w1 slice
    b += 2 * tf * d_model * wb              # w2 slice
    b += 2 * (tf + d_model) * 4             # biases
    b += 2 * tm * d_model * out_bytes       # output tile (double buffered)
    b += tm * d_model * 4                   # f32 accumulator scratch
    b += 2 * tm * tf * 4                    # relu intermediate + compiler temporaries
    return b


def _choose_tiles(m, d_model, d_ff, x_bytes, out_bytes, budget):
    """Pick (tm, tf, weights_resident)."""
    cap = max(128, _round_up(m, 128))
    tm_cands = [t for t in (1024, 512, 256, 128) if t <= cap] or [128]

    # 1) Weights-resident: tf = d_ff, weights DMA'd once for the whole kernel.
    for tm in tm_cands:
        if _working_set_bytes(tm, d_ff, d_model, x_bytes, out_bytes) <= budget:
            return tm, d_ff, True

    # 2) Stream d_ff chunks of the weights; keep tm at the roofline value and shrink tf
    #    first (shrinking tm lowers arithmetic intensity w.r.t. streamed weight bytes).
    tf_cands = [t for t in (4096, 2048, 1024, 512, 256, 128) if d_ff % t == 0] or [d_ff]
    for tm in tm_cands:
        for tf in tf_cands:
            if _working_set_bytes(tm, tf, d_model, x_bytes, out_bytes) <= budget:
                return tm, tf, False

    # 3) Last resort: smallest aligned tiles (still >= 128 rows).
    return tm_cands[-1], tf_cands[-1], False


# ----------------------------------------------------------------------------
# Fused FFN kernel
# ----------------------------------------------------------------------------
def _ffn_kernel(x_ref, w1_ref, b1_ref, w2_ref, b2_ref, o_ref, acc_ref):
    """o = relu(x @ w1 + b1) @ w2 + b2, accumulated over d_ff chunks (grid axis 1).

    Per grid step (i, j):
      x_ref  : (tm, d_model)  input dtype  (same block for all j -> stays resident)
      w1_ref : (d_model, tf)  bf16
      b1_ref : (1, tf)        f32
      w2_ref : (tf, d_model)  bf16
      b2_ref : (1, d_model)   f32
      o_ref  : (tm, d_model)  x.dtype      (same block for all j -> accumulator output)
      acc_ref: (tm, d_model)  f32          VMEM scratch accumulator
    """
    j = pl.program_id(1)

    @pl.when(j == 0)
    def _init():
        acc_ref[...] = jnp.zeros_like(acc_ref)

    # First matmul: cast the activation tile to bf16 in-kernel (no wrapper-side cast pass),
    # f32 accumulation on the MXU, bias + ReLU entirely in VMEM.
    x = x_ref[...].astype(w1_ref.dtype)
    h = jnp.dot(x, w1_ref[...], preferred_element_type=jnp.float32)
    h = jnp.maximum(h + b1_ref[...], 0.0)

    # Second matmul against the matching d_ff slice of w2; accumulate in f32.
    acc_ref[...] += jnp.dot(
        h.astype(w2_ref.dtype), w2_ref[...], preferred_element_type=jnp.float32
    )

    @pl.when(j == pl.num_programs(1) - 1)
    def _finalize():
        o_ref[...] = (acc_ref[...] + b2_ref[...]).astype(o_ref.dtype)


def positionwise_feed_forward(x, w1, b1, w2, b2):
    """x: [..., d_model] -> [..., d_model].  w1: [d_model, d_ff], w2: [d_ff, d_model]."""
    orig_shape = x.shape
    d_model = orig_shape[-1]
    d_ff = w1.shape[1]
    out_dtype = x.dtype

    x2d = x.reshape(-1, d_model)
    m = x2d.shape[0]

    vmem_limit, budget = _vmem_limits()
    x_bytes = jnp.dtype(x2d.dtype).itemsize
    out_bytes = jnp.dtype(out_dtype).itemsize
    tm, tf, resident = _choose_tiles(m, d_model, d_ff, x_bytes, out_bytes, budget)

    # Pad rows up to a tile multiple (MXU-aligned tiles; padded rows sliced off below).
    # TODO(synk): for v7x megacore an even row-tile count would balance the two TCs exactly.
    m_pad = _round_up(m, tm)
    if m_pad != m:
        x2d = jnp.pad(x2d, ((0, m_pad - m), (0, 0)))

    # Weights should be pre-cast to bf16 once at init; astype is then a no-op here.
    w1_c = w1.astype(_MXU_DTYPE)
    w2_c = w2.astype(_MXU_DTYPE)
    b1_2d = b1.reshape(1, d_ff).astype(jnp.float32)
    b2_2d = b2.reshape(1, d_model).astype(jnp.float32)

    grid = (m_pad // tm, d_ff // tf)  # reduction (d_ff) axis last

    if resident:
        # Constant index_maps: w1/w2/b1 are DMA'd from HBM exactly once and stay resident
        # in VMEM across all row tiles (no per-row-tile re-streaming of the weights).
        # TODO(synk): pipeline_mode=pl.Buffered(1) on these specs would reclaim the idle
        # second buffer; omitted to stay on the conservative/portable lowering path.
        w1_spec = pl.BlockSpec((d_model, tf), lambda i, j: (0, 0))
        b1_spec = pl.BlockSpec((1, tf), lambda i, j: (0, 0))
        w2_spec = pl.BlockSpec((tf, d_model), lambda i, j: (0, 0))
    else:
        w1_spec = pl.BlockSpec((d_model, tf), lambda i, j: (0, j))
        b1_spec = pl.BlockSpec((1, tf), lambda i, j: (0, j))
        w2_spec = pl.BlockSpec((tf, d_model), lambda i, j: (j, 0))

    out = pl.pallas_call(
        _ffn_kernel,
        out_shape=jax.ShapeDtypeStruct((m_pad, d_model), out_dtype),
        grid_spec=pltpu.PrefetchScalarGridSpec(
            num_scalar_prefetch=0,
            grid=grid,
            in_specs=[
                pl.BlockSpec((tm, d_model), lambda i, j: (i, 0)),
                w1_spec,
                b1_spec,
                w2_spec,
                pl.BlockSpec((1, d_model), lambda i, j: (0, 0)),
            ],
            out_specs=pl.BlockSpec((tm, d_model), lambda i, j: (i, 0)),
            scratch_shapes=[pltpu.VMEM((tm, d_model), jnp.float32)],
        ),
        compiler_params=pltpu.CompilerParams(
            dimension_semantics=("parallel", "arbitrary"),
            vmem_limit_bytes=vmem_limit,
        ),
    )(x2d, w1_c, b1_2d, w2_c, b2_2d)

    if m_pad != m:
        out = out[:m]
    return out.reshape(orig_shape)


# ----------------------------------------------------------------------------
if __name__ == "__main__":
    B, S, D_MODEL, D_FF = 2, 8, 32, 64

    key = jax.random.PRNGKey(0)
    kx, k1, kb1, k2, kb2 = jax.random.split(key, 5)

    # nn.Linear-style uniform init (deterministic).
    lim1 = 1.0 / np.sqrt(D_MODEL)
    lim2 = 1.0 / np.sqrt(D_FF)
    x = jax.random.normal(kx, (B, S, D_MODEL), jnp.float32)
    w1 = jax.random.uniform(k1, (D_MODEL, D_FF), jnp.float32, -lim1, lim1)
    b1 = jax.random.uniform(kb1, (D_FF,), jnp.float32, -lim1, lim1)
    w2 = jax.random.uniform(k2, (D_FF, D_MODEL), jnp.float32, -lim2, lim2)
    b2 = jax.random.uniform(kb2, (D_MODEL,), jnp.float32, -lim2, lim2)

    # One-off, init-time cast of the weights to the MXU dtype (per the perf review).
    w1_p = w1.astype(_MXU_DTYPE)
    w2_p = w2.astype(_MXU_DTYPE)

    ffn = jax.jit(positionwise_feed_forward)
    out = ffn(x, w1_p, b1, w2_p, b2)
    jax.block_until_ready(out)

    # Pure-JAX f32 reference (loose tolerance: MXU operands are bf16).
    ref = jnp.maximum(x.reshape(-1, D_MODEL) @ w1 + b1, 0.0) @ w2 + b2
    ref = ref.reshape(B, S, D_MODEL)
    np.testing.assert_allclose(np.asarray(out), np.asarray(ref), rtol=2e-2, atol=2e-2)

    assert out.shape == (B, S, D_MODEL) and out.dtype == x.dtype
    print("KERNEL_OK")
</pallas_src>

<mosaic_0001>
module attributes {stable_mosaic.version = 11 : i64} {
  func.func @_ffn_kernel(%arg0: i32, %arg1: i32, %arg2: memref<128x32xf32, #tpu.memory_space<vmem>>, %arg3: memref<32x64xbf16, #tpu.memory_space<vmem>>, %arg4: memref<1x64xf32, #tpu.memory_space<vmem>>, %arg5: memref<64x32xbf16, #tpu.memory_space<vmem>>, %arg6: memref<1x32xf32, #tpu.memory_space<vmem>>, %arg7: memref<128x32xf32, #tpu.memory_space<vmem>>, %arg8: memref<128x32xf32, #tpu.memory_space<vmem>>) attributes {dimension_semantics = [#tpu.dimension_semantics<parallel>, #tpu.dimension_semantics<arbitrary>], iteration_bounds = array<i64: 1, 1>, scalar_prefetch = 0 : i64, scratch_operands = 1 : i64, tpu.core_type = #tpu.core_type<tc>, window_params = [{transform_indices = @transform_0, window_bounds = array<i64: 128, 32>}, {pipeline_mode = #tpu.pipeline_mode<synchronous>, transform_indices = @transform_1, window_bounds = array<i64: 32, 64>}, {pipeline_mode = #tpu.pipeline_mode<synchronous>, transform_indices = @transform_2, window_bounds = array<i64: 1, 64>}, {pipeline_mode = #tpu.pipeline_mode<synchronous>, transform_indices = @transform_3, window_bounds = array<i64: 64, 32>}, {pipeline_mode = #tpu.pipeline_mode<synchronous>, transform_indices = @transform_4, window_bounds = array<i64: 1, 32>}, {transform_indices = @transform_5, window_bounds = array<i64: 128, 32>}]} {
    %c0_i32 = arith.constant 0 : i32
    %0 = arith.cmpi eq, %arg1, %c0_i32 : i32
    %1 = arith.extui %0 : i1 to i32
    %c0_i32_0 = arith.constant 0 : i32
    %2 = arith.cmpi ne, %1, %c0_i32_0 : i32
    scf.if %2 {
      %cst_16 = arith.constant 0.000000e+00 : f32
      %21 = vector.broadcast %cst_16 : f32 to vector<128x32xf32>
      %c0_17 = arith.constant 0 : index
      %c0_18 = arith.constant 0 : index
      %22 = vector.load %arg8[%c0_17, %c0_18] : memref<128x32xf32, #tpu.memory_space<vmem>>, vector<128x32xf32>
      tpu.vector_store %arg8[%c0_17, %c0_18], %21 {strides = array<i32>} : memref<128x32xf32, #tpu.memory_space<vmem>>, vector<128x32xf32>,
    } else {
    }
    %c0 = arith.constant 0 : index
    %c0_1 = arith.constant 0 : index
    %3 = vector.load %arg2[%c0, %c0_1] : memref<128x32xf32, #tpu.memory_space<vmem>>, vector<128x32xf32>
    %4 = arith.truncf %3 : vector<128x32xf32> to vector<128x32xbf16>
    %c0_2 = arith.constant 0 : index
    %c0_3 = arith.constant 0 : index
    %5 = vector.load %arg3[%c0_2, %c0_3] : memref<32x64xbf16, #tpu.memory_space<vmem>>, vector<32x64xbf16>
    %cst = arith.constant dense<0.000000e+00> : vector<128x64xf32>
    %6 = tpu.matmul %4, %5, %cst {dimension_numbers = #tpu.dot_dimension_numbers<[1], [0], [0], [1], [0, 0, 1, 1], [], []>} : vector<128x32xbf16>, vector<32x64xbf16>, vector<128x64xf32> -> vector<128x64xf32>
    %c0_4 = arith.constant 0 : index
    %c0_5 = arith.constant 0 : index
    %7 = vector.load %arg4[%c0_4, %c0_5] : memref<1x64xf32, #tpu.memory_space<vmem>>, vector<1x64xf32>
    %8 = vector.broadcast %7 : vector<1x64xf32> to vector<128x64xf32>
    %9 = arith.addf %6, %8 : vector<128x64xf32>
    %cst_6 = arith.constant 0.000000e+00 : f32
    %10 = vector.broadcast %cst_6 : f32 to vector<128x64xf32>
    %11 = arith.maximumf %9, %10 : vector<128x64xf32>
    %c0_7 = arith.constant 0 : index
    %c0_8 = arith.constant 0 : index
    %12 = vector.load %arg8[%c0_7, %c0_8] : memref<128x32xf32, #tpu.memory_space<vmem>>, vector<128x32xf32>
    %13 = arith.truncf %11 : vector<128x64xf32> to vector<128x64xbf16>
    %c0_9 = arith.constant 0 : index
    %c0_10 = arith.constant 0 : index
    %14 = vector.load %arg5[%c0_9, %c0_10] : memref<64x32xbf16, #tpu.memory_space<vmem>>, vector<64x32xbf16>
    %cst_11 = arith.constant dense<0.000000e+00> : vector<128x32xf32>
    %15 = tpu.matmul %13, %14, %cst_11 {dimension_numbers = #tpu.dot_dimension_numbers<[1], [0], [0], [1], [0, 0, 1, 1], [], []>} : vector<128x64xbf16>, vector<64x32xbf16>, vector<128x32xf32> -> vector<128x32xf32>
    %16 = arith.addf %12, %15 : vector<128x32xf32>
    %c0_12 = arith.constant 0 : index
    %c0_13 = arith.constant 0 : index
    %17 = vector.load %arg8[%c0_12, %c0_13] : memref<128x32xf32, #tpu.memory_space<vmem>>, vector<128x32xf32>
    tpu.vector_store %arg8[%c0_12, %c0_13], %16 {strides = array<i32>} : memref<128x32xf32, #tpu.memory_space<vmem>>, vector<128x32xf32>,
    %c0_i32_14 = arith.constant 0 : i32
    %18 = arith.cmpi eq, %arg1, %c0_i32_14 : i32
    %19 = arith.extui %18 : i1 to i32
    %c0_i32_15 = arith.constant 0 : i32
    %20 = arith.cmpi ne, %19, %c0_i32_15 : i32
    scf.if %20 {
      %c0_16 = arith.constant 0 : index
      %c0_17 = arith.constant 0 : index
      %21 = vector.load %arg8[%c0_16, %c0_17] : memref<128x32xf32, #tpu.memory_space<vmem>>, vector<128x32xf32>
      %c0_18 = arith.constant 0 : index
      %c0_19 = arith.constant 0 : index
      %22 = vector.load %arg6[%c0_18, %c0_19] : memref<1x32xf32, #tpu.memory_space<vmem>>, vector<1x32xf32>
      %23 = vector.broadcast %22 : vector<1x32xf32> to vector<128x32xf32>
      %24 = arith.addf %21, %23 : vector<128x32xf32>
      %c0_20 = arith.constant 0 : index
      %c0_21 = arith.constant 0 : index
      %25 = vector.load %arg7[%c0_20, %c0_21] : memref<128x32xf32, #tpu.memory_space<vmem>>, vector<128x32xf32>
      tpu.vector_store %arg7[%c0_20, %c0_21], %24 {strides = array<i32>} : memref<128x32xf32, #tpu.memory_space<vmem>>, vector<128x32xf32>,
    } else {
    }
    return
  }
  func.func @transform_0(%arg0: i32, %arg1: i32) -> (i32, i32) {
    %c0_i32 = arith.constant 0 : i32
    %c0_i32_0 = arith.constant 0 : i32
    return %arg0, %c0_i32 : i32, i32
  }
  func.func @transform_1(%arg0: i32, %arg1: i32) -> (i32, i32) {
    %c0_i32 = arith.constant 0 : i32
    %c0_i32_0 = arith.constant 0 : i32
    %c0_i32_1 = arith.constant 0 : i32
    return %c0_i32, %c0_i32_0 : i32, i32
  }
  func.func @transform_2(%arg0: i32, %arg1: i32) -> (i32, i32) {
    %c0_i32 = arith.constant 0 : i32
    %c0_i32_0 = arith.constant 0 : i32
    %c0_i32_1 = arith.constant 0 : i32
    return %c0_i32, %c0_i32_0 : i32, i32
  }
  func.func @transform_3(%arg0: i32, %arg1: i32) -> (i32, i32) {
    %c0_i32 = arith.constant 0 : i32
    %c0_i32_0 = arith.constant 0 : i32
    %c0_i32_1 = arith.constant 0 : i32
    return %c0_i32, %c0_i32_0 : i32, i32
  }
  func.func @transform_4(%arg0: i32, %arg1: i32) -> (i32, i32) {
    %c0_i32 = arith.constant 0 : i32
    %c0_i32_0 = arith.constant 0 : i32
    %c0_i32_1 = arith.constant 0 : i32
    return %c0_i32, %c0_i32_0 : i32, i32
  }
  func.func @transform_5(%arg0: i32, %arg1: i32) -> (i32, i32) {
    %c0_i32 = arith.constant 0 : i32
    %c0_i32_0 = arith.constant 0 : i32
    return %arg0, %c0_i32 : i32, i32
  }
}

</mosaic_0001>

<llo_original>
// kernel: positionwise_feed_forward.1
$region0: #{positionwise_feed_forward.1}
  #allocation0 [shape = 'u32[]', space=smem, size = 0x4, offset = 0x4, fixed_abs, tag = 'smem constant byte address 0x4 - core index']
  #allocation1 [shape = 'u32[144,128]{1,0:T(1,128)}', space=vmem, size = 0x12000, scoped, tag = 'internal scratch']
  #allocation2 [shape = 'f32[128,32]{1,0:T(8,128)}', space=vmem, size = 0x10000, scoped, tag = 'scratch operand']
  %s0 = inlined_call_operand.vmem [shape: f32[128,32], index: 0, kind: input, shape index: {}]
  %s1 = inlined_call_operand.vmem [shape: bf16[32,64], index: 1, kind: input, shape index: {}]
  %s2 = inlined_call_operand.vmem [shape: f32[1,64], index: 2, kind: input, shape index: {}]
  %s3 = inlined_call_operand.vmem [shape: bf16[64,32], index: 3, kind: input, shape index: {}]
  %s4 = inlined_call_operand.vmem [shape: f32[1,32], index: 4, kind: input, shape index: {}]
  %s5 = inlined_call_operand.vmem [shape: f32[128,32], index: 5, kind: output, shape index: {}]
  %s6 = sld [smem:[#allocation0]]
  $region38: #{positionwise_feed_forward.1} parent=0
    _
  %s8 = ssub.s32 1, %s6
  %s9 = scalar_select 0, %s8, %s6
  // Predicated region
  $region2: #{positionwise_feed_forward.1} parent=0 // pred_check
    _
  $region3: #{positionwise_feed_forward.1} parent=0 // pred_check_branch
    %11 = sbr.rel (0) target = $region5
  $region4: #{positionwise_feed_forward.1} parent=0 // pred_region
    _
  $region5: #{positionwise_feed_forward.1} parent=0 // pred_fallthru
    _
  // Predicated region
  $region6: #{positionwise_feed_forward.1} parent=0 // pred_check
    _
  $region7: #{positionwise_feed_forward.1} parent=0 // pred_check_branch
    %13 = sbr.rel (0) target = $region9
  $region8: #{positionwise_feed_forward.1} parent=0 // pred_region
    _
  $region9: #{positionwise_feed_forward.1} parent=0 // pred_fallthru
    _
  // Predicated region
  $region10: #{positionwise_feed_forward.1} parent=0 // pred_check
    _
  $region11: #{positionwise_feed_forward.1} parent=0 // pred_check_branch
    %15 = sbr.rel (0) target = $region13
  $region12: #{positionwise_feed_forward.1} parent=0 // pred_region
    _
  $region13: #{positionwise_feed_forward.1} parent=0 // pred_fallthru
    _
  // Predicated region
  $region14: #{positionwise_feed_forward.1} parent=0 // pred_check
    _
  $region15: #{positionwise_feed_forward.1} parent=0 // pred_check_branch
    %17 = sbr.rel (0) target = $region17
  $region16: #{positionwise_feed_forward.1} parent=0 // pred_region
    _
  $region17: #{positionwise_feed_forward.1} parent=0 // pred_fallthru
    _
  // Predicated region
  $region18: #{positionwise_feed_forward.1} parent=0 // pred_check
    _
  $region19: #{positionwise_feed_forward.1} parent=0 // pred_check_branch
    %19 = sbr.rel (0) target = $region21
  $region20: #{positionwise_feed_forward.1} parent=0 // pred_region
    _
  $region21: #{positionwise_feed_forward.1} parent=0 // pred_fallthru
    _
  %p21 = scmp.eq.s32.totalorder 0, 0
  // Predicated region
  $region22: #{positionwise_feed_forward.1} parent=0 // pred_check
    %p22 = pneg %p21
  $region23: #{positionwise_feed_forward.1} parent=0 // pred_check_branch
    %24 = sbr.rel (%p22) target = $region25
  $region24: #{positionwise_feed_forward.1} parent=0 // pred_region
    %vm25 = vcmask 261120
    %26 = vst.msk [vmem:[#allocation2] sm:$0xff] %vm25, 0.0
    %27 = vst.msk [vmem:[#allocation2 + $0x8] sm:$0xff] %vm25, 0.0
    %28 = vst.msk [vmem:[#allocation2 + $0x10] sm:$0xff] %vm25, 0.0
    %29 = vst.msk [vmem:[#allocation2 + $0x18] sm:$0xff] %vm25, 0.0
    %30 = vst.msk [vmem:[#allocation2 + $0x20] sm:$0xff] %vm25, 0.0
    %31 = vst.msk [vmem:[#allocation2 + $0x28] sm:$0xff] %vm25, 0.0
    %32 = vst.msk [vmem:[#allocation2 + $0x30] sm:$0xff] %vm25, 0.0
    %33 = vst.msk [vmem:[#allocation2 + $0x38] sm:$0xff] %vm25, 0.0
    %34 = vst.msk [vmem:[#allocation2 + $0x40] sm:$0xff] %vm25, 0.0
    %35 = vst.msk [vmem:[#allocation2 + $0x48] sm:$0xff] %vm25, 0.0
    %36 = vst.msk [vmem:[#allocation2 + $0x50] sm:$0xff] %vm25, 0.0
    %37 = vst.msk [vmem:[#allocation2 + $0x58] sm:$0xff] %vm25, 0.0
    %38 = vst.msk [vmem:[#allocation2 + $0x60] sm:$0xff] %vm25, 0.0
    %39 = vst.msk [vmem:[#allocation2 + $0x68] sm:$0xff] %vm25, 0.0
    %40 = vst.msk [vmem:[#allocation2 + $0x70] sm:$0xff] %vm25, 0.0
    %41 = vst.msk [vmem:[#allocation2 + $0x78] sm:$0xff] %vm25, 0.0
  $region25: #{positionwise_feed_forward.1} parent=0 // pred_fallthru
    _
  %v42 = vld [vmem:[%s0] sm:$0xff]
  %v43 = vld [vmem:[%s0 + $0x8] sm:$0xff]
  %v44 = vld [vmem:[%s0 + $0x10] sm:$0xff]
  %v45 = vld [vmem:[%s0 + $0x18] sm:$0xff]
  %v46 = vld [vmem:[%s0 + $0x20] sm:$0xff]
  %v47 = vld [vmem:[%s0 + $0x28] sm:$0xff]
  %v48 = vld [vmem:[%s0 + $0x30] sm:$0xff]
  %v49 = vld [vmem:[%s0 + $0x38] sm:$0xff]
  %v50 = vld [vmem:[%s0 + $0x40] sm:$0xff]
  %v51 = vld [vmem:[%s0 + $0x48] sm:$0xff]
  %v52 = vld [vmem:[%s0 + $0x50] sm:$0xff]
  %v53 = vld [vmem:[%s0 + $0x58] sm:$0xff]
  %v54 = vld [vmem:[%s0 + $0x60] sm:$0xff]
  %v55 = vld [vmem:[%s0 + $0x68] sm:$0xff]
  %v56 = vld [vmem:[%s0 + $0x70] sm:$0xff]
  %v57 = vld [vmem:[%s0 + $0x78] sm:$0xff]
  %v58 = vpack.c.bf16 %v43, %v42
  %v59 = vpack.c.bf16 %v45, %v44
  %v60 = vpack.c.bf16 %v47, %v46
  %v61 = vpack.c.bf16 %v49, %v48
  %v62 = vpack.c.bf16 %v51, %v50
  %v63 = vpack.c.bf16 %v53, %v52
  %v64 = vpack.c.bf16 %v55, %v54
  %v65 = vpack.c.bf16 %v57, %v56
  %v66 = vld [vmem:[%s1] sm:$0xf]
  %v67 = vld [vmem:[%s1 + $0x4] sm:$0xf]
  %v68 = vld [vmem:[%s1 + $0x8] sm:$0xf]
  %v69 = vld [vmem:[%s1 + $0xc] sm:$0xf]
  %v70 = vld [vmem:[%s2] sm:$0x1]
  %v72 = vlaneseq
  %v73 = vshrl.u32 %v72, 7
  %v74 = vsub.s32 0, %v73
  %v75 = vrot.slane %v70, %v74
  %v81 = vunpack.c.l.b16 %v66
  %v82 = vunpack.c.l.b16 %v67
  %v83 = vunpack.c.l.b16 %v68
  %v84 = vunpack.c.l.b16 %v69
  %v85 = vpack.c.b16 %v82, %v81
  %v86 = vpack.c.b16 %v84, %v83
  %vm89 = vcmask 261120
  %v91 = vsel %vm89, %v58, 0
  %v94 = vsel %vm89, %v59, 0
  %v97 = vsel %vm89, %v60, 0
  %v100 = vsel %vm89, %v61, 0
  %v103 = vsel %vm89, %v62, 0
  %v106 = vsel %vm89, %v63, 0
  %v109 = vsel %vm89, %v64, 0
  %v112 = vsel %vm89, %v65, 0
  %114 = vmatprep.subr.bf16.mxu0 0
  %115 = vmatpush1.bf16.msra.mxu0 %v85
  %116 = vmatprep.subr.bf16.mxu0 0
  %117 = vmatpush1.bf16.msra.mxu0 %v86
  %118 = vmatprep.subr.bf16.mxu0 0
  %119 = vmatpush1.bf16.msra.mxu0 0
  %120 = vmatprep.subr.bf16.mxu0 0
  %121 = vmatpush1.bf16.msra.mxu0 0
  %122 = vmatprep.subr.bf16.mxu0 0
  %123 = vmatpush1.bf16.msra.mxu0 0
  %124 = vmatprep.subr.bf16.mxu0 0
  %125 = vmatpush1.bf16.msra.mxu0 0
  %126 = vmatprep.subr.bf16.mxu0 0
  %127 = vmatpush1.bf16.msra.mxu0 0
  %128 = vmatprep.subr.bf16.mxu0 0
  %129 = vmatpush1.bf16.msra.mxu0 0
  %130 = vmatprep.subr.bf16.mxu0 0
  %131 = vmatpush1.bf16.msra.mxu0 0
  %132 = vmatprep.subr.bf16.mxu0 0
  %133 = vmatpush1.bf16.msra.mxu0 0
  %134 = vmatprep.subr.bf16.mxu0 0
  %135 = vmatpush1.bf16.msra.mxu0 0
  %136 = vmatprep.subr.bf16.mxu0 0
  %137 = vmatpush1.bf16.msra.mxu0 0
  %138 = vmatprep.subr.bf16.mxu0 0
  %139 = vmatpush1.bf16.msra.mxu0 0
  %140 = vmatprep.subr.bf16.mxu0 0
  %141 = vmatpush1.bf16.msra.mxu0 0
  %142 = vmatprep.subr.bf16.mxu0 0
  %143 = vmatpush1.bf16.msra.mxu0 0
  %144 = vmatprep.subr.bf16.mxu0 0
  %145 = vmatpush1.bf16.msra.mxu0 0
  %146 = vmatprep.mubr.bf16.mxu0 0
  %147 = vmatmul.mubr.bf16.gmra.mrb[0].mxu0 %v91
  %v148 = vpop.f32.mrb[0].mxu0
  %v149 = vadd.f32 %v75, %v148
  %v150 = vpop.f32.mrb[0].mxu0
  %v151 = vpop.f32.mrb[0].mxu0
  %v152 = vadd.f32 %v75, %v151
  %v153 = vpop.f32.mrb[0].mxu0
  %154 = vmatprep.mubr.bf16.mxu0 0
  %155 = vmatmul.mubr.bf16.gmra.mrb[0].mxu0 %v94
  %v156 = vpop.f32.mrb[0].mxu0
  %v157 = vadd.f32 %v75, %v156
  %v158 = vpop.f32.mrb[0].mxu0
  %v159 = vpop.f32.mrb[0].mxu0
  %v160 = vadd.f32 %v75, %v159
  %v161 = vpop.f32.mrb[0].mxu0
  %162 = vmatprep.mubr.bf16.mxu0 0
  %163 = vmatmul.mubr.bf16.gmra.mrb[0].mxu0 %v97
  %v164 = vpop.f32.mrb[0].mxu0
  %v165 = vadd.f32 %v75, %v164
  %v166 = vpop.f32.mrb[0].mxu0
  %v167 = vpop.f32.mrb[0].mxu0
  %v168 = vadd.f32 %v75, %v167
  %v169 = vpop.f32.mrb[0].mxu0
  %170 = vmatprep.mubr.bf16.mxu0 0
  %171 = vmatmul.mubr.bf16.gmra.mrb[0].mxu0 %v100
  %v172 = vpop.f32.mrb[0].mxu0
  %v173 = vadd.f32 %v75, %v172
  %v174 = vpop.f32.mrb[0].mxu0
  %v175 = vpop.f32.mrb[0].mxu0
  %v176 = vadd.f32 %v75, %v175
  %v177 = vpop.f32.mrb[0].mxu0
  %178 = vmatprep.mubr.bf16.mxu0 0
  %179 = vmatmul.mubr.bf16.gmra.mrb[0].mxu0 %v103
  %v180 = vpop.f32.mrb[0].mxu0
  %v181 = vadd.f32 %v75, %v180
  %v182 = vpop.f32.mrb[0].mxu0
  %v183 = vpop.f32.mrb[0].mxu0
  %v184 = vadd.f32 %v75, %v183
  %v185 = vpop.f32.mrb[0].mxu0
  %186 = vmatprep.mubr.bf16.mxu0 0
  %187 = vmatmul.mubr.bf16.gmra.mrb[0].mxu0 %v106
  %v188 = vpop.f32.mrb[0].mxu0
  %v189 = vadd.f32 %v75, %v188
  %v190 = vpop.f32.mrb[0].mxu0
  %v191 = vpop.f32.mrb[0].mxu0
  %v192 = vadd.f32 %v75, %v191
  %v193 = vpop.f32.mrb[0].mxu0
  %194 = vmatprep.mubr.bf16.mxu0 0
  %195 = vmatmul.mubr.bf16.gmra.mrb[0].mxu0 %v109
  %v196 = vpop.f32.mrb[0].mxu0
  %v197 = vadd.f32 %v75, %v196
  %v198 = vpop.f32.mrb[0].mxu0
  %v199 = vpop.f32.mrb[0].mxu0
  %v200 = vadd.f32 %v75, %v199
  %v201 = vpop.f32.mrb[0].mxu0
  %202 = vmatprep.mubr.bf16.mxu0 0
  %203 = vmatmul.mubr.bf16.gmra.mrb[0].mxu0 %v112
  %v204 = vpop.f32.mrb[0].mxu0
  %v205 = vadd.f32 %v75, %v204
  %v206 = vpop.f32.mrb[0].mxu0
  %v207 = vpop.f32.mrb[0].mxu0
  %v208 = vadd.f32 %v75, %v207
  %v209 = vpop.f32.mrb[0].mxu0
  %210 = vdwg.mxu0
  %v211 = vmax.f32 %v149, 0.0
  %v212 = vmax.f32 %v152, 0.0
  %v213 = vmax.f32 %v157, 0.0
  %v214 = vmax.f32 %v160, 0.0
  %v215 = vmax.f32 %v165, 0.0
  %v216 = vmax.f32 %v168, 0.0
  %v217 = vmax.f32 %v173, 0.0
  %v218 = vmax.f32 %v176, 0.0
  %v219 = vmax.f32 %v181, 0.0
  %v220 = vmax.f32 %v184, 0.0
  %v221 = vmax.f32 %v189, 0.0
  %v222 = vmax.f32 %v192, 0.0
  %v223 = vmax.f32 %v197, 0.0
  %v224 = vmax.f32 %v200, 0.0
  %v225 = vmax.f32 %v205, 0.0
  %v226 = vmax.f32 %v208, 0.0
  %v227 = vld [vmem:[#allocation2] sm:$0xff]
  %v228 = vld [vmem:[#allocation2 + $0x8] sm:$0xff]
  %v229 = vld [vmem:[#allocation2 + $0x10] sm:$0xff]
  %v230 = vld [vmem:[#allocation2 + $0x18] sm:$0xff]
  %v231 = vld [vmem:[#allocation2 + $0x20] sm:$0xff]
  %v232 = vld [vmem:[#allocation2 + $0x28] sm:$0xff]
  %v233 = vld [vmem:[#allocation2 + $0x30] sm:$0xff]
  %v234 = vld [vmem:[#allocation2 + $0x38] sm:$0xff]
  %v235 = vld [vmem:[#allocation2 + $0x40] sm:$0xff]
  %v236 = vld [vmem:[#allocation2 + $0x48] sm:$0xff]
  %v237 = vld [vmem:[#allocation2 + $0x50] sm:$0xff]
  %v238 = vld [vmem:[#allocation2 + $0x58] sm:$0xff]
  %v239 = vld [vmem:[#allocation2 + $0x60] sm:$0xff]
  %v240 = vld [vmem:[#allocation2 + $0x68] sm:$0xff]
  %v241 = vld [vmem:[#allocation2 + $0x70] sm:$0xff]
  %v242 = vld [vmem:[#allocation2 + $0x78] sm:$0xff]
  %v243 = vpack.c.bf16 %v212, %v211
  %v244 = vpack.c.bf16 %v214, %v213
  %v245 = vpack.c.bf16 %v216, %v215
  %v246 = vpack.c.bf16 %v218, %v217
  %v247 = vpack.c.bf16 %v220, %v219
  %v248 = vpack.c.bf16 %v222, %v221
  %v249 = vpack.c.bf16 %v224, %v223
  %v250 = vpack.c.bf16 %v226, %v225
  %v251 = vld [vmem:[%s3] sm:$0xf]
  %v252 = vld [vmem:[%s3 + $0x4] sm:$0xf]
  %v253 = vld [vmem:[%s3 + $0x8] sm:$0xf]
  %v254 = vld [vmem:[%s3 + $0xc] sm:$0xf]
  %v255 = vld [vmem:[%s3 + $0x10] sm:$0xf]
  %v256 = vld [vmem:[%s3 + $0x14] sm:$0xf]
  %v257 = vld [vmem:[%s3 + $0x18] sm:$0xf]
  %v258 = vld [vmem:[%s3 + $0x1c] sm:$0xf]
  %v267 = vunpack.c.l.b16 %v251
  %v268 = vunpack.c.l.b16 %v252
  %v269 = vunpack.c.l.b16 %v253
  %v270 = vunpack.c.l.b16 %v254
  %v271 = vunpack.c.l.b16 %v255
  %v272 = vunpack.c.l.b16 %v256
  %v273 = vunpack.c.l.b16 %v257
  %v274 = vunpack.c.l.b16 %v258
  %v275 = vpack.c.b16 %v268, %v267
  %v276 = vpack.c.b16 %v270, %v269
  %v277 = vpack.c.b16 %v272, %v271
  %v278 = vpack.c.b16 %v274, %v273
  %vm283 = vcmask 523264
  %v285 = vsel %vm283, %v243, 0
  %v288 = vsel %vm283, %v244, 0
  %v291 = vsel %vm283, %v245, 0
  %v294 = vsel %vm283, %v246, 0
  %v297 = vsel %vm283, %v247, 0
  %v300 = vsel %vm283, %v248, 0
  %v303 = vsel %vm283, %v249, 0
  %v306 = vsel %vm283, %v250, 0
  %308 = vmatprep.subr.bf16.mxu0 0
  %309 = vmatpush1.bf16.msra.mxu0 %v275
  %310 = vmatprep.subr.bf16.mxu0 0
  %311 = vmatpush1.bf16.msra.mxu0 %v276
  %312 = vmatprep.subr.bf16.mxu0 0
  %313 = vmatpush1.bf16.msra.mxu0 %v277
  %314 = vmatprep.subr.bf16.mxu0 0
  %315 = vmatpush1.bf16.msra.mxu0 %v278
  %316 = vmatprep.subr.bf16.mxu0 0
  %317 = vmatpush1.bf16.msra.mxu0 0
  %318 = vmatprep.subr.bf16.mxu0 0
  %319 = vmatpush1.bf16.msra.mxu0 0
  %320 = vmatprep.subr.bf16.mxu0 0
  %321 = vmatpush1.bf16.msra.mxu0 0
  %322 = vmatprep.subr.bf16.mxu0 0
  %323 = vmatpush1.bf16.msra.mxu0 0
  %324 = vmatprep.subr.bf16.mxu0 0
  %325 = vmatpush1.bf16.msra.mxu0 0
  %326 = vmatprep.subr.bf16.mxu0 0
  %327 = vmatpush1.bf16.msra.mxu0 0
  %328 = vmatprep.subr.bf16.mxu0 0
  %329 = vmatpush1.bf16.msra.mxu0 0
  %330 = vmatprep.subr.bf16.mxu0 0
  %331 = vmatpush1.bf16.msra.mxu0 0
  %332 = vmatprep.subr.bf16.mxu0 0
  %333 = vmatpush1.bf16.msra.mxu0 0
  %334 = vmatprep.subr.bf16.mxu0 0
  %335 = vmatpush1.bf16.msra.mxu0 0
  %336 = vmatprep.subr.bf16.mxu0 0
  %337 = vmatpush1.bf16.msra.mxu0 0
  %338 = vmatprep.subr.bf16.mxu0 0
  %339 = vmatpush1.bf16.msra.mxu0 0
  %340 = vmatprep.mubr.bf16.mxu0 0
  %341 = vmatmul.mubr.bf16.gmra.mrb[0].mxu0 %v285
  %v342 = vpop.f32.mrb[0].mxu0
  %v343 = vadd.f32 0.0, %v342
  %v344 = vpop.f32.mrb[0].mxu0
  %v345 = vpop.f32.mrb[0].mxu0
  %v346 = vadd.f32 0.0, %v345
  %v347 = vpop.f32.mrb[0].mxu0
  %348 = vmatprep.mubr.bf16.mxu0 0
  %349 = vmatmul.mubr.bf16.gmra.mrb[0].mxu0 %v288
  %v350 = vpop.f32.mrb[0].mxu0
  %v351 = vadd.f32 0.0, %v350
  %v352 = vpop.f32.mrb[0].mxu0
  %v353 = vpop.f32.mrb[0].mxu0
  %v354 = vadd.f32 0.0, %v353
  %v355 = vpop.f32.mrb[0].mxu0
  %356 = vmatprep.mubr.bf16.mxu0 0
  %357 = vmatmul.mubr.bf16.gmra.mrb[0].mxu0 %v291
  %v358 = vpop.f32.mrb[0].mxu0
  %v359 = vadd.f32 0.0, %v358
  %v360 = vpop.f32.mrb[0].mxu0
  %v361 = vpop.f32.mrb[0].mxu0
  %v362 = vadd.f32 0.0, %v361
  %v363 = vpop.f32.mrb[0].mxu0
  %364 = vmatprep.mubr.bf16.mxu0 0
  %365 = vmatmul.mubr.bf16.gmra.mrb[0].mxu0 %v294
  %v366 = vpop.f32.mrb[0].mxu0
  %v367 = vadd.f32 0.0, %v366
  %v368 = vpop.f32.mrb[0].mxu0
  %v369 = vpop.f32.mrb[0].mxu0
  %v370 = vadd.f32 0.0, %v369
  %v371 = vpop.f32.mrb[0].mxu0
  %372 = vmatprep.mubr.bf16.mxu0 0
  %373 = vmatmul.mubr.bf16.gmra.mrb[0].mxu0 %v297
  %v374 = vpop.f32.mrb[0].mxu0
  %v375 = vadd.f32 0.0, %v374
  %v376 = vpop.f32.mrb[0].mxu0
  %v377 = vpop.f32.mrb[0].mxu0
  %v378 = vadd.f32 0.0, %v377
  %v379 = vpop.f32.mrb[0].mxu0
  %380 = vmatprep.mubr.bf16.mxu0 0
  %381 = vmatmul.mubr.bf16.gmra.mrb[0].mxu0 %v300
  %v382 = vpop.f32.mrb[0].mxu0
  %v383 = vadd.f32 0.0, %v382
  %v384 = vpop.f32.mrb[0].mxu0
  %v385 = vpop.f32.mrb[0].mxu0
  %v386 = vadd.f32 0.0, %v385
  %v387 = vpop.f32.mrb[0].mxu0
  %388 = vmatprep.mubr.bf16.mxu0 0
  %389 = vmatmul.mubr.bf16.gmra.mrb[0].mxu0 %v303
  %v390 = vpop.f32.mrb[0].mxu0
  %v391 = vadd.f32 0.0, %v390
  %v392 = vpop.f32.mrb[0].mxu0
  %v393 = vpop.f32.mrb[0].mxu0
  %v394 = vadd.f32 0.0, %v393
  %v395 = vpop.f32.mrb[0].mxu0
  %396 = vmatprep.mubr.bf16.mxu0 0
  %397 = vmatmul.mubr.bf16.gmra.mrb[0].mxu0 %v306
  %v398 = vpop.f32.mrb[0].mxu0
  %v399 = vadd.f32 0.0, %v398
  %v400 = vpop.f32.mrb[0].mxu0
  %v401 = vpop.f32.mrb[0].mxu0
  %v402 = vadd.f32 0.0, %v401
  %v403 = vpop.f32.mrb[0].mxu0
  %404 = vdwg.mxu0
  %v405 = vadd.f32 %v227, %v343
  %v406 = vadd.f32 %v228, %v346
  %v407 = vadd.f32 %v229, %v351
  %v408 = vadd.f32 %v230, %v354
  %v409 = vadd.f32 %v231, %v359
  %v410 = vadd.f32 %v232, %v362
  %v411 = vadd.f32 %v233, %v367
  %v412 = vadd.f32 %v234, %v370
  %v413 = vadd.f32 %v235, %v375
  %v414 = vadd.f32 %v236, %v378
  %v415 = vadd.f32 %v237, %v383
  %v416 = vadd.f32 %v238, %v386
  %v417 = vadd.f32 %v239, %v391
  %v418 = vadd.f32 %v240, %v394
  %v419 = vadd.f32 %v241, %v399
  %v420 = vadd.f32 %v242, %v402
  %421 = vst.msk [vmem:[#allocation2] sm:$0xff] %vm89, %v405
  %422 = vst.msk [vmem:[#allocation2 + $0x8] sm:$0xff] %vm89, %v406
  %423 = vst.msk [vmem:[#allocation2 + $0x10] sm:$0xff] %vm89, %v407
  %424 = vst.msk [vmem:[#allocation2 + $0x18] sm:$0xff] %vm89, %v408
  %425 = vst.msk [vmem:[#allocation2 + $0x20] sm:$0xff] %vm89, %v409
  %426 = vst.msk [vmem:[#allocation2 + $0x28] sm:$0xff] %vm89, %v410
  %427 = vst.msk [vmem:[#allocation2 + $0x30] sm:$0xff] %vm89, %v411
  %428 = vst.msk [vmem:[#allocation2 + $0x38] sm:$0xff] %vm89, %v412
  %429 = vst.msk [vmem:[#allocation2 + $0x40] sm:$0xff] %vm89, %v413
  %430 = vst.msk [vmem:[#allocation2 + $0x48] sm:$0xff] %vm89, %v414
  %431 = vst.msk [vmem:[#allocation2 + $0x50] sm:$0xff] %vm89, %v415
  %432 = vst.msk [vmem:[#allocation2 + $0x58] sm:$0xff] %vm89, %v416
  %433 = vst.msk [vmem:[#allocation2 + $0x60] sm:$0xff] %vm89, %v417
  %434 = vst.msk [vmem:[#allocation2 + $0x68] sm:$0xff] %vm89, %v418
  %435 = vst.msk [vmem:[#allocation2 + $0x70] sm:$0xff] %vm89, %v419
  %436 = vst.msk [vmem:[#allocation2 + $0x78] sm:$0xff] %vm89, %v420
  // Predicated region
  $region26: #{positionwise_feed_forward.1} parent=0 // pred_check
    %p437 = pneg %p21
  $region27: #{positionwise_feed_forward.1} parent=0 // pred_check_branch
    %439 = sbr.rel (%p437) target = $region29
  $region28: #{positionwise_feed_forward.1} parent=0 // pred_region
    %v440 = vld [vmem:[#allocation2] sm:$0xff]
    %v441 = vld [vmem:[#allocation2 + $0x8] sm:$0xff]
    %v442 = vld [vmem:[#allocation2 + $0x10] sm:$0xff]
    %v443 = vld [vmem:[#allocation2 + $0x18] sm:$0xff]
    %v444 = vld [vmem:[#allocation2 + $0x20] sm:$0xff]
    %v445 = vld [vmem:[#allocation2 + $0x28] sm:$0xff]
    %v446 = vld [vmem:[#allocation2 + $0x30] sm:$0xff]
    %v447 = vld [vmem:[#allocation2 + $0x38] sm:$0xff]
    %v448 = vld [vmem:[#allocation2 + $0x40] sm:$0xff]
    %v449 = vld [vmem:[#allocation2 + $0x48] sm:$0xff]
    %v450 = vld [vmem:[#allocation2 + $0x50] sm:$0xff]
    %v451 = vld [vmem:[#allocation2 + $0x58] sm:$0xff]
    %v452 = vld [vmem:[#allocation2 + $0x60] sm:$0xff]
    %v453 = vld [vmem:[#allocation2 + $0x68] sm:$0xff]
    %v454 = vld [vmem:[#allocation2 + $0x70] sm:$0xff]
    %v455 = vld [vmem:[#allocation2 + $0x78] sm:$0xff]
    %v456 = vld [vmem:[%s4] sm:$0x1]
    %v458 = vlaneseq
    %v459 = vshrl.u32 %v458, 7
    %v460 = vsub.s32 0, %v459
    %v461 = vrot.slane %v456, %v460
    %v463 = vadd.f32 %v440, %v461
    %v464 = vadd.f32 %v441, %v461
    %v465 = vadd.f32 %v442, %v461
    %v466 = vadd.f32 %v443, %v461
    %v467 = vadd.f32 %v444, %v461
    %v468 = vadd.f32 %v445, %v461
    %v469 = vadd.f32 %v446, %v461
    %v470 = vadd.f32 %v447, %v461
    %v471 = vadd.f32 %v448, %v461
    %v472 = vadd.f32 %v449, %v461
    %v473 = vadd.f32 %v450, %v461
    %v474 = vadd.f32 %v451, %v461
    %v475 = vadd.f32 %v452, %v461
    %v476 = vadd.f32 %v453, %v461
    %v477 = vadd.f32 %v454, %v461
    %v478 = vadd.f32 %v455, %v461
    %479 = vst.msk [vmem:[%s5] sm:$0xff] %vm89, %v463
    %480 = vst.msk [vmem:[%s5 + $0x8] sm:$0xff] %vm89, %v464
    %481 = vst.msk [vmem:[%s5 + $0x10] sm:$0xff] %vm89, %v465
    %482 = vst.msk [vmem:[%s5 + $0x18] sm:$0xff] %vm89, %v466
    %483 = vst.msk [vmem:[%s5 + $0x20] sm:$0xff] %vm89, %v467
    %484 = vst.msk [vmem:[%s5 + $0x28] sm:$0xff] %vm89, %v468
    %485 = vst.msk [vmem:[%s5 + $0x30] sm:$0xff] %vm89, %v469
    %486 = vst.msk [vmem:[%s5 + $0x38] sm:$0xff] %vm89, %v470
    %487 = vst.msk [vmem:[%s5 + $0x40] sm:$0xff] %vm89, %v471
    %488 = vst.msk [vmem:[%s5 + $0x48] sm:$0xff] %vm89, %v472
    %489 = vst.msk [vmem:[%s5 + $0x50] sm:$0xff] %vm89, %v473
    %490 = vst.msk [vmem:[%s5 + $0x58] sm:$0xff] %vm89, %v474
    %491 = vst.msk [vmem:[%s5 + $0x60] sm:$0xff] %vm89, %v475
    %492 = vst.msk [vmem:[%s5 + $0x68] sm:$0xff] %vm89, %v476
    %493 = vst.msk [vmem:[%s5 + $0x70] sm:$0xff] %vm89, %v477
    %494 = vst.msk [vmem:[%s5 + $0x78] sm:$0xff] %vm89, %v478
  $region29: #{positionwise_feed_forward.1} parent=0 // pred_fallthru
    _
  // Predicated region
  $region30: #{positionwise_feed_forward.1} parent=0 // pred_check
    _
  $region31: #{positionwise_feed_forward.1} parent=0 // pred_check_branch
    %496 = sbr.rel (0) target = $region33
  $region32: #{positionwise_feed_forward.1} parent=0 // pred_region
    _
  $region33: #{positionwise_feed_forward.1} parent=0 // pred_fallthru
    _
  // Predicated region
  $region34: #{positionwise_feed_forward.1} parent=0 // pred_check
    _
  $region35: #{positionwise_feed_forward.1} parent=0 // pred_check_branch
    %498 = sbr.rel (0) target = $region37
  $region36: #{positionwise_feed_forward.1} parent=0 // pred_region
    _
  $region37: #{positionwise_feed_forward.1} parent=0 // pred_fallthru
    _

</llo_original>
